<compile_context>
chip_gen: v5e
topology: v5e:2x2
jax: 0.10.0
libtpu: 0.0.40
codegen_flags: <defaults>
</compile_context>

<pallas_src>
import functools
import math

import jax
import jax.numpy as jnp
from jax.experimental import pallas as pl
from jax.experimental.pallas import tpu as pltpu

_EPS = 1e-08
_LOG_EPS = math.log(_EPS)
# meta columns: [trg, btrg, d_base, l_base, d_trg, l_trg, d_btrg, l_btrg, d_pad, l_pad]
_META_COLS = 10


def _biased_kl_kernel(meta_ref, pred_ref, out_ref, *, pad_idx, tv, n_vocab_blocks):
    pred = pred_ref[...].astype(jnp.float32)                 # (TN, TV)

    trg = meta_ref[:, 0:1].astype(jnp.int32)                 # ids stored as f32 values
    btrg = meta_ref[:, 1:2].astype(jnp.int32)                # (exact for V < 2^24)
    d_base = meta_ref[:, 2:3]
    l_base = meta_ref[:, 3:4]
    d_trg = meta_ref[:, 4:5]
    l_trg = meta_ref[:, 5:6]
    d_btrg = meta_ref[:, 6:7]
    l_btrg = meta_ref[:, 7:8]
    d_padc = meta_ref[:, 8:9]
    l_padc = meta_ref[:, 9:10]

    if n_vocab_blocks > 1:
        # Shift the per-row ids (TN,1) instead of adding j*tv to the full-width iota.
        col0 = pl.program_id(1) * tv
        trg = trg - col0
        btrg = btrg - col0

    col = jax.lax.broadcasted_iota(jnp.int32, pred.shape, 1)
    is_trg = col == trg
    is_btrg = col == btrg

    # dist + 1e-8 takes at most 4 distinct values per row in the bulk; target
    # lane wins over biased-target lane.  Logs are precomputed -> no EUP work.
    d = jnp.where(is_trg, d_trg, jnp.where(is_btrg, d_btrg, d_base))
    logd = jnp.where(is_trg, l_trg, jnp.where(is_btrg, l_btrg, l_base))
    # KLDivLoss(reduction='none'): d * (log(d) - pred)
    out_ref[...] = (d * (logd - pred)).astype(out_ref.dtype)

    # Patch the single pad column (its value when trg/btrg == pad_idx is folded
    # into d_padc / l_padc in the wrapper) with one narrow lane store.
    pad_pos = pad_idx % tv

    def _patch_pad_col():
        p = pred_ref[:, pad_pos:pad_pos + 1].astype(jnp.float32)
        out_ref[:, pad_pos:pad_pos + 1] = (d_padc * (l_padc - p)).astype(out_ref.dtype)

    if n_vocab_blocks > 1:
        @pl.when(pl.program_id(1) == pad_idx // tv)
        def _():
            _patch_pad_col()
    else:
        _patch_pad_col()


def _num_tensorcores():
    try:
        kind = jax.devices()[0].device_kind.lower()
    except Exception:
        return 1
    for tag in ("v7", "v4", "v5p"):
        if tag in kind:
            return 2
    return 1


def _vmem_limit_bytes():
    try:
        cap = int(pltpu.get_tpu_info().vmem_capacity_bytes)
    except Exception:
        cap = 64 << 20            # v7x physical VMEM: safe lower bound everywhere
    return int(max(32 << 20, min(cap * 3 // 4, 100 << 20)))


def _round_up(x, m):
    return -(-x // m) * m


def _choose_tiles(n_rows, vocab, vmem_limit, pred_bytes, out_bytes, row_align, num_cores):
    """Pick (row_tile, vocab_tile).  Budget ~= 2x double-buffered pred-in +
    2x double-buffered out + ~2 f32 tiles of headroom for fused-chain temps."""
    budget = vmem_limit - (4 << 20)              # lane-padded meta tiles + temps
    bytes_per_elem = 2 * pred_bytes + 2 * out_bytes + 8

    def rows_for(tv):
        return int(budget // (bytes_per_elem * tv)) // row_align * row_align

    # Prefer the full vocab per tile: contiguous DMAs, no j grid axis.
    if rows_for(vocab) >= row_align:
        tv = vocab
    else:
        tv = 0
        for cand in range(vocab // 128, 0, -1):  # largest multiple-of-128 divisor
            c = cand * 128
            if vocab % c == 0 and rows_for(c) >= row_align:
                tv = c
                break
        if tv == 0:
            # No divisor fits (huge, oddly-sized vocab): largest mult-of-128 tile
            # that fits; the last vocab block is ragged and masked by Pallas.
            tv_max = int(budget // (bytes_per_elem * row_align)) // 128 * 128
            tv = max(128, min(tv_max, (vocab // 128) * 128))

    row_tile = min(rows_for(tv), _round_up(n_rows, row_align))
    row_tile = max(row_tile, row_align)

    # Only split a single-step problem across cores on 2-TensorCore chips.
    if num_cores > 1 and row_tile >= n_rows and n_rows > row_align:
        row_tile = max(row_align, _round_up(-(-n_rows // num_cores), row_align))

    # Snap to a divisor of n_rows when it does not shrink the tile by >2x, so
    # the last row block is not ragged (ragged blocks are still correct).
    if n_rows % row_tile != 0:
        for cand in range(row_tile, 0, -row_align):
            if n_rows % cand == 0:
                if cand * 2 >= row_tile:
                    row_tile = cand
                break
    return row_tile, tv


def biased_kl(pred, trg, biased_trg, biased_offset, *, label_smoothing, pad_idx):
    """Pallas implementation of BiasedKL.forward.

    pred: (B, S, V) log-probabilities; trg, biased_trg: (B, S) int;
    biased_offset: (B, S) float.  Returns (B*S, V) elementwise KL (reduction='none').
    """
    B, S, V = pred.shape
    N = B * S
    pad_idx = int(pad_idx)

    ls = float(label_smoothing)
    trg_factor = 1.0 - ls
    base = ls / (V - 2)

    pred2 = pred.reshape(N, V)                   # view; no dtype copy in HBM
    out_dtype = pred2.dtype
    target = trg.reshape(N).astype(jnp.int32)
    btrg = biased_trg.reshape(N).astype(jnp.int32)
    off = biased_offset.reshape(N).astype(jnp.float32)

    # torch quirk kept faithfully: mask.sum() sums pad-row *indices*, so a pad
    # token only at flattened row 0 does NOT trigger the row zero-fill.
    # TODO(synk): confirm with the model owner whether this upstream behaviour is intended.
    pad_rows = target == pad_idx
    idx = jnp.arange(N, dtype=jnp.int32)
    mask_sum = jnp.sum(jnp.where(pad_rows, idx, 0))
    mask_len = jnp.sum(pad_rows.astype(jnp.int32))
    apply_fill = jnp.logical_and(mask_sum > 0, mask_len > 0)
    row_zero = jnp.logical_and(pad_rows, apply_fill)

    keep = jnp.where(row_zero, 0.0, 1.0).astype(jnp.float32)   # 0 on zeroed rows
    base_scale = base * keep
    trg_ampl = (trg_factor * (1.0 - off)) * keep
    normed_off = (trg_factor * off) * keep

    # Per-row values of d = dist + 1e-8 at the special lanes / bulk, plus logs.
    d_base = base_scale + _EPS
    d_trg = (jnp.where(pad_rows, 0.0, trg_ampl)
             + jnp.where(target == btrg, normed_off, 0.0) + _EPS)
    d_btrg = jnp.where(btrg == pad_idx, 0.0, base_scale) + normed_off + _EPS
    l_base, l_trg, l_btrg = jnp.log(d_base), jnp.log(d_trg), jnp.log(d_btrg)
    d_padc = jnp.where(pad_rows, d_trg, jnp.where(btrg == pad_idx, d_btrg, _EPS))
    l_padc = jnp.where(pad_rows, l_trg, jnp.where(btrg == pad_idx, l_btrg, _LOG_EPS))

    meta = jnp.stack([target.astype(jnp.float32), btrg.astype(jnp.float32),
                      d_base, l_base, d_trg, l_trg, d_btrg, l_btrg,
                      d_padc, l_padc], axis=1).astype(jnp.float32)     # (N, 10)

    pred_bytes = pred2.dtype.itemsize
    out_bytes = jnp.dtype(out_dtype).itemsize
    row_align = {1: 32, 2: 16, 4: 8}.get(min(pred_bytes, out_bytes), 8)

    vmem_limit = _vmem_limit_bytes()
    num_cores = _num_tensorcores()
    row_tile, tv = _choose_tiles(N, V, vmem_limit, pred_bytes, out_bytes,
                                 row_align, num_cores)

    n_row_blocks = pl.cdiv(N, row_tile)
    n_vocab_blocks = pl.cdiv(V, tv)

    kernel = functools.partial(_biased_kl_kernel, pad_idx=pad_idx, tv=tv,
                               n_vocab_blocks=n_vocab_blocks)

    if n_vocab_blocks == 1:
        grid = (n_row_blocks,)
        in_specs = [pl.BlockSpec((row_tile, _META_COLS), lambda i: (i, 0)),
                    pl.BlockSpec((row_tile, tv), lambda i: (i, 0))]
        out_specs = pl.BlockSpec((row_tile, tv), lambda i: (i, 0))
        dim_sem = ("parallel",)
    else:
        grid = (n_row_blocks, n_vocab_blocks)
        in_specs = [pl.BlockSpec((row_tile, _META_COLS), lambda i, j: (i, 0)),
                    pl.BlockSpec((row_tile, tv), lambda i, j: (i, j))]
        out_specs = pl.BlockSpec((row_tile, tv), lambda i, j: (i, j))
        dim_sem = ("parallel", "parallel")

    out = pl.pallas_call(
        kernel,
        out_shape=jax.ShapeDtypeStruct((N, V), out_dtype),
        grid_spec=pltpu.PrefetchScalarGridSpec(
            num_scalar_prefetch=0,
            grid=grid,
            in_specs=in_specs,
            out_specs=out_specs),
        compiler_params=pltpu.CompilerParams(
            dimension_semantics=dim_sem,
            vmem_limit_bytes=int(vmem_limit)),
    )(meta, pred2)
    return out


def biased_kl_reference(pred, trg, biased_trg, biased_offset, *, label_smoothing, pad_idx):
    """Pure-JAX reference mirroring the PyTorch module (for verification)."""
    B, S, V = pred.shape
    N = B * S
    ls = label_smoothing
    trg_factor = 1.0 - ls
    pred2 = pred.reshape(N, V).astype(jnp.float32)
    target = trg.reshape(N)
    btrg = biased_trg.reshape(N)
    off = biased_offset.reshape(N).astype(jnp.float32)

    trg_ampl = trg_factor * (1.0 - off)
    normed_off = trg_factor * off

    dist = jnp.full((N, V), ls / (V - 2), jnp.float32)
    dist = dist.at[jnp.arange(N), target].set(trg_ampl)
    dist = dist.at[:, pad_idx].set(0.0)
    biased = jnp.zeros((N, V), jnp.float32).at[jnp.arange(N), btrg].set(normed_off)
    dist = dist + biased

    pad_rows = target == pad_idx
    idx = jnp.arange(N)
    apply_fill = jnp.logical_and(jnp.sum(jnp.where(pad_rows, idx, 0)) > 0,
                                 jnp.sum(pad_rows) > 0)
    dist = jnp.where((pad_rows & apply_fill)[:, None], 0.0, dist)

    d = dist + _EPS
    return d * (jnp.log(d) - pred2)


if __name__ == "__main__":
    B, S, V = 2, 8, 128
    label_smoothing = 0.1
    pad_idx = 0

    key = jax.random.PRNGKey(0)
    k1, k2, k3, k4 = jax.random.split(key, 4)

    logits = jax.random.normal(k1, (B, S, V), dtype=jnp.float32)
    pred = jax.nn.log_softmax(logits, axis=-1)                      # log-probs
    trg = jax.random.randint(k2, (B, S), 0, V, dtype=jnp.int32)
    trg = trg.at[0, 1].set(pad_idx)                                 # pad tokens
    trg = trg.at[1, 3].set(pad_idx)
    biased_trg = jax.random.randint(k3, (B, S), 0, V, dtype=jnp.int32)
    biased_trg = biased_trg.at[0, 2].set(int(trg[0, 2]))            # btrg == trg case
    biased_trg = biased_trg.at[1, 5].set(pad_idx)                   # btrg == pad case
    biased_offset = jax.random.uniform(k4, (B, S), dtype=jnp.float32, maxval=0.5)

    out = biased_kl(pred, trg, biased_trg, biased_offset,
                    label_smoothing=label_smoothing, pad_idx=pad_idx)
    out = jax.block_until_ready(out)

    ref = biased_kl_reference(pred, trg, biased_trg, biased_offset,
                              label_smoothing=label_smoothing, pad_idx=pad_idx)
    assert out.shape == (B * S, V)
    assert jnp.allclose(out.astype(jnp.float32), ref, atol=1e-5, rtol=1e-5)

    print("KERNEL_OK")
</pallas_src>

<mosaic_0001>
module attributes {stable_mosaic.version = 11 : i64} {
  func.func @_biased_kl_kernel(%arg0: i32, %arg1: memref<16x10xf32, #tpu.memory_space<vmem>>, %arg2: memref<16x128xf32, #tpu.memory_space<vmem>>, %arg3: memref<16x128xf32, #tpu.memory_space<vmem>>) attributes {dimension_semantics = [#tpu.dimension_semantics<parallel>], iteration_bounds = array<i64: 1>, scalar_prefetch = 0 : i64, scratch_operands = 0 : i64, tpu.core_type = #tpu.core_type<tc>, window_params = [{transform_indices = @transform_0, window_bounds = array<i64: 16, 10>}, {transform_indices = @transform_1, window_bounds = array<i64: 16, 128>}, {transform_indices = @transform_2, window_bounds = array<i64: 16, 128>}]} {
    %c0 = arith.constant 0 : index
    %c0_0 = arith.constant 0 : index
    %0 = vector.load %arg2[%c0, %c0_0] : memref<16x128xf32, #tpu.memory_space<vmem>>, vector<16x128xf32>
    %c0_1 = arith.constant 0 : index
    %c0_2 = arith.constant 0 : index
    %1 = vector.load %arg1[%c0_1, %c0_2] : memref<16x10xf32, #tpu.memory_space<vmem>>, vector<16x1xf32>
    %2 = arith.fptosi %1 : vector<16x1xf32> to vector<16x1xi32>
    %c0_3 = arith.constant 0 : index
    %c1 = arith.constant 1 : index
    %3 = vector.load %arg1[%c0_3, %c1] : memref<16x10xf32, #tpu.memory_space<vmem>>, vector<16x1xf32>
    %4 = arith.fptosi %3 : vector<16x1xf32> to vector<16x1xi32>
    %c0_4 = arith.constant 0 : index
    %c2 = arith.constant 2 : index
    %5 = vector.load %arg1[%c0_4, %c2] : memref<16x10xf32, #tpu.memory_space<vmem>>, vector<16x1xf32>
    %c0_5 = arith.constant 0 : index
    %c3 = arith.constant 3 : index
    %6 = vector.load %arg1[%c0_5, %c3] : memref<16x10xf32, #tpu.memory_space<vmem>>, vector<16x1xf32>
    %c0_6 = arith.constant 0 : index
    %c4 = arith.constant 4 : index
    %7 = vector.load %arg1[%c0_6, %c4] : memref<16x10xf32, #tpu.memory_space<vmem>>, vector<16x1xf32>
    %c0_7 = arith.constant 0 : index
    %c5 = arith.constant 5 : index
    %8 = vector.load %arg1[%c0_7, %c5] : memref<16x10xf32, #tpu.memory_space<vmem>>, vector<16x1xf32>
    %c0_8 = arith.constant 0 : index
    %c6 = arith.constant 6 : index
    %9 = vector.load %arg1[%c0_8, %c6] : memref<16x10xf32, #tpu.memory_space<vmem>>, vector<16x1xf32>
    %c0_9 = arith.constant 0 : index
    %c7 = arith.constant 7 : index
    %10 = vector.load %arg1[%c0_9, %c7] : memref<16x10xf32, #tpu.memory_space<vmem>>, vector<16x1xf32>
    %c0_10 = arith.constant 0 : index
    %c8 = arith.constant 8 : index
    %11 = vector.load %arg1[%c0_10, %c8] : memref<16x10xf32, #tpu.memory_space<vmem>>, vector<16x1xf32>
    %c0_11 = arith.constant 0 : index
    %c9 = arith.constant 9 : index
    %12 = vector.load %arg1[%c0_11, %c9] : memref<16x10xf32, #tpu.memory_space<vmem>>, vector<16x1xf32>
    %13 = tpu.iota {dimensions = array<i32: 1>} : vector<16x128xi32>
    %14 = vector.broadcast %2 : vector<16x1xi32> to vector<16x128xi32>
    %15 = arith.cmpi eq, %13, %14 : vector<16x128xi32>
    %16 = vector.broadcast %4 : vector<16x1xi32> to vector<16x128xi32>
    %17 = arith.cmpi eq, %13, %16 : vector<16x128xi32>
    %18 = vector.shape_cast %9 : vector<16x1xf32> to vector<16x1xf32>
    %19 = vector.broadcast %18 : vector<16x1xf32> to vector<16x128xf32>
    %20 = vector.shape_cast %5 : vector<16x1xf32> to vector<16x1xf32>
    %21 = vector.broadcast %20 : vector<16x1xf32> to vector<16x128xf32>
    %22 = arith.select %17, %19, %21 : vector<16x128xi1>, vector<16x128xf32>
    %23 = vector.shape_cast %7 : vector<16x1xf32> to vector<16x1xf32>
    %24 = vector.broadcast %23 : vector<16x1xf32> to vector<16x128xf32>
    %25 = arith.select %15, %24, %22 : vector<16x128xi1>, vector<16x128xf32>
    %26 = vector.shape_cast %10 : vector<16x1xf32> to vector<16x1xf32>
    %27 = vector.broadcast %26 : vector<16x1xf32> to vector<16x128xf32>
    %28 = vector.shape_cast %6 : vector<16x1xf32> to vector<16x1xf32>
    %29 = vector.broadcast %28 : vector<16x1xf32> to vector<16x128xf32>
    %30 = arith.select %17, %27, %29 : vector<16x128xi1>, vector<16x128xf32>
    %31 = vector.shape_cast %8 : vector<16x1xf32> to vector<16x1xf32>
    %32 = vector.broadcast %31 : vector<16x1xf32> to vector<16x128xf32>
    %33 = arith.select %15, %32, %30 : vector<16x128xi1>, vector<16x128xf32>
    %34 = arith.subf %33, %0 : vector<16x128xf32>
    %35 = arith.mulf %25, %34 : vector<16x128xf32>
    %c0_12 = arith.constant 0 : index
    %c0_13 = arith.constant 0 : index
    %36 = vector.load %arg3[%c0_12, %c0_13] : memref<16x128xf32, #tpu.memory_space<vmem>>, vector<16x128xf32>
    tpu.vector_store %arg3[%c0_12, %c0_13], %35 {strides = array<i32>} : memref<16x128xf32, #tpu.memory_space<vmem>>, vector<16x128xf32>,
    %c0_14 = arith.constant 0 : index
    %c0_15 = arith.constant 0 : index
    %37 = vector.load %arg2[%c0_14, %c0_15] : memref<16x128xf32, #tpu.memory_space<vmem>>, vector<16x1xf32>
    %38 = arith.subf %12, %37 : vector<16x1xf32>
    %39 = arith.mulf %11, %38 : vector<16x1xf32>
    %c0_16 = arith.constant 0 : index
    %c0_17 = arith.constant 0 : index
    %40 = vector.load %arg3[%c0_16, %c0_17] : memref<16x128xf32, #tpu.memory_space<vmem>>, vector<16x1xf32>
    tpu.vector_store %arg3[%c0_16, %c0_17], %39 {strides = array<i32>} : memref<16x128xf32, #tpu.memory_space<vmem>>, vector<16x1xf32>,
    return
  }
  func.func @transform_0(%arg0: i32) -> (i32, i32) {
    %c0_i32 = arith.constant 0 : i32
    %c0_i32_0 = arith.constant 0 : i32
    return %arg0, %c0_i32 : i32, i32
  }
  func.func @transform_1(%arg0: i32) -> (i32, i32) {
    %c0_i32 = arith.constant 0 : i32
    %c0_i32_0 = arith.constant 0 : i32
    return %arg0, %c0_i32 : i32, i32
  }
  func.func @transform_2(%arg0: i32) -> (i32, i32) {
    %c0_i32 = arith.constant 0 : i32
    %c0_i32_0 = arith.constant 0 : i32
    return %arg0, %c0_i32 : i32, i32
  }
}

</mosaic_0001>

<llo_original>
// kernel: tpu_custom_call.1
$region0: #{tpu_custom_call.1}
  #allocation0 [shape = 'u32[]', space=smem, size = 0x4, offset = 0x4, fixed_abs, tag = 'smem constant byte address 0x4 - core index']
  #allocation1 [shape = 'u32[72,128]{1,0:T(1,128)}', space=vmem, size = 0x9000, scoped, tag = 'internal scratch']
  %s0 = inlined_call_operand.hbm [shape: f32[16,10], index: 0, kind: input, shape index: {}]
  %s1 = inlined_call_operand.hbm [shape: f32[16,128], index: 1, kind: input, shape index: {}]
  %s2 = inlined_call_operand.hbm [shape: f32[16,128], index: 2, kind: output, shape index: {}]
  %s3 = sld [smem:[#allocation0]]
  $region26: #{tpu_custom_call.1} parent=0
    _
  %s5 = ssub.s32 1, %s3
  %s6 = scalar_select 0, %s5, %s3
  $region1: #{tpu_custom_call.1} parent=0
    #allocation2 [shape = 'u8[8192]{0}', space=vmem, size = 0x2000, scoped, tag = 'input window, operand 0, single buffered']
    #allocation3 [shape = 's32[1]{0}', space=sflag, size = 0x4, scoped, tag = 'scoped memory for tpu_custom_call.1']
    #allocation4 [shape = 's32[1]{0}', space=sflag, size = 0x4, scoped, tag = 'scoped memory for tpu_custom_call.1']
    #allocation5 [shape = 'u8[8192]{0}', space=vmem, size = 0x2000, scoped, tag = 'input window, operand 1, single buffered']
    #allocation6 [shape = 's32[1]{0}', space=sflag, size = 0x4, scoped, tag = 'scoped memory for tpu_custom_call.1']
    #allocation7 [shape = 'u8[8192]{0}', space=vmem, size = 0x2000, scoped, tag = 'output window, operand 0, single buffered']
    %7 = vsyncpa [#allocation3], 0
    %8 = vsyncpa [#allocation6], 0
    %9 = vsyncpa [#allocation4], 0
    // Predicated region
    $region2: #{tpu_custom_call.1} parent=1 // pred_check
      _
    $region3: #{tpu_custom_call.1} parent=1 // pred_check_branch
      %11 = sbr.rel (0) target = $region5
    $region4: #{tpu_custom_call.1} parent=1 // pred_region
      %13 = vsyncadd [#allocation3], 0
      %s14 = sshll.u32 %s0, 4
      %s15 = int_to_ptr.hbm [resolvable:$true] %s14
      %s16 = sshll.u32 [#allocation2], 4
      %s17 = int_to_ptr.vmem [resolvable:$true] %s16
      %22 = dma.hbm_to_vmem [thread:$0]  %s15, 256, %s17, [#allocation3], 128, 128, 8
    $region5: #{tpu_custom_call.1} parent=1 // pred_fallthru
      _
    // Predicated region
    $region6: #{tpu_custom_call.1} parent=1 // pred_check
      _
    $region7: #{tpu_custom_call.1} parent=1 // pred_check_branch
      %24 = sbr.rel (0) target = $region9
    $region8: #{tpu_custom_call.1} parent=1 // pred_region
      %26 = vsyncadd [#allocation6], 0
      %s27 = sshll.u32 %s1, 4
      %s28 = int_to_ptr.hbm [resolvable:$true] %s27
      %s29 = sshll.u32 [#allocation5], 4
      %s30 = int_to_ptr.vmem [resolvable:$true] %s29
      %35 = dma.hbm_to_vmem [thread:$0]  %s28, 256, %s30, [#allocation6], 128, 128, 8
    $region9: #{tpu_custom_call.1} parent=1 // pred_fallthru
      _
    // Predicated region
    $region10: #{tpu_custom_call.1} parent=1 // pred_check
      _
    $region11: #{tpu_custom_call.1} parent=1 // pred_check_branch
      %37 = sbr.rel (0) target = $region13
    $region12: #{tpu_custom_call.1} parent=1 // pred_region
      %39 = dma.done [#allocation3], 256
    $region13: #{tpu_custom_call.1} parent=1 // pred_fallthru
      _
    // Predicated region
    $region14: #{tpu_custom_call.1} parent=1 // pred_check
      _
    $region15: #{tpu_custom_call.1} parent=1 // pred_check_branch
      %41 = sbr.rel (0) target = $region17
    $region16: #{tpu_custom_call.1} parent=1 // pred_region
      %43 = dma.done [#allocation6], 256
    $region17: #{tpu_custom_call.1} parent=1 // pred_fallthru
      _
    %v44 = vld [vmem:[#allocation5] sm:$0xff]
    %v45 = vld [vmem:[#allocation5 + $0x8] sm:$0xff]
    %v46 = vld [vmem:[#allocation2] sm:$0xff]
    %v47 = vld [vmem:[#allocation2 + $0x8] sm:$0xff]
    %v48 = vcvt.f32.s32.to.zero.pseudo %v46
    %v49 = vcvt.f32.s32.to.zero.pseudo %v47
    %v50 = vlaneseq
    %v51 = vand.u32 %v50, 127
    %52 = vset.pattern.permute.xlu0 0
    %53 = vperm.xlu0 %52, %v48
    %v54 = vpop.permute.xlu0 %53
    %55 = vset.pattern.permute.xlu0 0
    %56 = vperm.xlu0 %55, %v49
    %v57 = vpop.permute.xlu0 %56
    %vm58 = vcmp.eq.s32.totalorder %v51, %v54
    %vm59 = vcmp.eq.s32.totalorder %v51, %v57
    %60 = vset.pattern.permute.xlu0 1
    %61 = vperm.xlu0 %60, %v48
    %v62 = vpop.permute.xlu0 %61
    %63 = vset.pattern.permute.xlu0 1
    %64 = vperm.xlu0 %63, %v49
    %v65 = vpop.permute.xlu0 %64
    %vm66 = vcmp.eq.s32.totalorder %v51, %v62
    %vm67 = vcmp.eq.s32.totalorder %v51, %v65
    %69 = vset.pattern.permute.xlu0 6
    %70 = vperm.xlu0 %69, %v46
    %v71 = vpop.permute.xlu0 %70
    %74 = vset.pattern.permute.xlu0 6
    %75 = vperm.xlu0 %74, %v47
    %v76 = vpop.permute.xlu0 %75
    %78 = vset.pattern.permute.xlu0 2
    %79 = vperm.xlu0 %78, %v46
    %v80 = vpop.permute.xlu0 %79
    %82 = vset.pattern.permute.xlu0 2
    %83 = vperm.xlu0 %82, %v47
    %v84 = vpop.permute.xlu0 %83
    %v86 = vsel %vm66, %v71, %v80
    %v87 = vsel %vm67, %v76, %v84
    %88 = vset.pattern.permute.xlu0 4
    %89 = vperm.xlu0 %88, %v46
    %v90 = vpop.permute.xlu0 %89
    %92 = vset.pattern.permute.xlu0 4
    %93 = vperm.xlu0 %92, %v47
    %v94 = vpop.permute.xlu0 %93
    %v96 = vsel %vm58, %v90, %v86
    %v97 = vsel %vm59, %v94, %v87
    %98 = vset.pattern.permute.xlu0 7
    %99 = vperm.xlu0 %98, %v46
    %v100 = vpop.permute.xlu0 %99
    %102 = vset.pattern.permute.xlu0 7
    %103 = vperm.xlu0 %102, %v47
    %v104 = vpop.permute.xlu0 %103
    %106 = vset.pattern.permute.xlu0 3
    %107 = vperm.xlu0 %106, %v46
    %v108 = vpop.permute.xlu0 %107
    %110 = vset.pattern.permute.xlu0 3
    %111 = vperm.xlu0 %110, %v47
    %v112 = vpop.permute.xlu0 %111
    %v114 = vsel %vm66, %v100, %v108
    %v115 = vsel %vm67, %v104, %v112
    %116 = vset.pattern.permute.xlu0 5
    %117 = vperm.xlu0 %116, %v46
    %v118 = vpop.permute.xlu0 %117
    %120 = vset.pattern.permute.xlu0 5
    %121 = vperm.xlu0 %120, %v47
    %v122 = vpop.permute.xlu0 %121
    %v124 = vsel %vm58, %v118, %v114
    %v125 = vsel %vm59, %v122, %v115
    %v126 = vsub.f32 %v124, %v44
    %v127 = vsub.f32 %v125, %v45
    %v128 = vmul.f32 %v96, %v126
    %v129 = vmul.f32 %v97, %v127
    %130 = vst [vmem:[#allocation7] sm:$0xff] %v128
    %131 = vst [vmem:[#allocation7 + $0x8] sm:$0xff] %v129
    %v132 = vld [vmem:[#allocation5] sm:$0xff]
    %v133 = vld [vmem:[#allocation5 + $0x8] sm:$0xff]
    %136 = vrot.lane.b32.xlu0 %v132, 9
    %v137 = vpop.permute.xlu0 %136
    %138 = vrot.lane.b32.xlu0 %v133, 9
    %v139 = vpop.permute.xlu0 %138
    %v142 = vsub.f32 %v46, %v137
    %v143 = vsub.f32 %v47, %v139
    %146 = vrot.lane.b32.xlu0 %v142, 127
    %v147 = vpop.permute.xlu0 %146
    %148 = vrot.lane.b32.xlu0 %v143, 127
    %v149 = vpop.permute.xlu0 %148
    %v152 = vmul.f32 %v46, %v147
    %v153 = vmul.f32 %v47, %v149
    %156 = vrot.lane.b32.xlu0 %v152, 120
    %v157 = vpop.permute.xlu0 %156
    %158 = vrot.lane.b32.xlu0 %v153, 120
    %v159 = vpop.permute.xlu0 %158
    %vm162 = vcmask 7168
    %163 = vst.msk [vmem:[#allocation7] sm:$0xff] %vm162, %v157
    %164 = vst.msk [vmem:[#allocation7 + $0x8] sm:$0xff] %vm162, %v159
    // Predicated region
    $region18: #{tpu_custom_call.1} parent=1 // pred_check
      _
    $region19: #{tpu_custom_call.1} parent=1 // pred_check_branch
      %166 = sbr.rel (0) target = $region21
    $region20: #{tpu_custom_call.1} parent=1 // pred_region
      %168 = vsyncadd [#allocation4], 0
      %s169 = sshll.u32 [#allocation7], 4
      %s170 = int_to_ptr.vmem [resolvable:$true] %s169
      %s171 = sshll.u32 %s2, 4
      %s172 = int_to_ptr.hbm [resolvable:$true] %s171
      %177 = dma.vmem_to_hbm [thread:$0]  %s170, 256, %s172, [#allocation4], 128, 128, 8
    $region21: #{tpu_custom_call.1} parent=1 // pred_fallthru
      _
    // Predicated region
    $region22: #{tpu_custom_call.1} parent=1 // pred_check
      _
    $region23: #{tpu_custom_call.1} parent=1 // pred_check_branch
      %179 = sbr.rel (0) target = $region25
    $region24: #{tpu_custom_call.1} parent=1 // pred_region
      %181 = dma.done [#allocation4], 256
    $region25: #{tpu_custom_call.1} parent=1 // pred_fallthru
      _
    %182 = vsyncpa [#allocation3], 1
    %183 = vsyncpa [#allocation6], 1
    %184 = vsyncpa [#allocation4], 1

</llo_original>
